<compile_context>
chip_gen: v7x
topology: tpu7x:2x2x1
jax: 0.10.0
libtpu: 0.0.40
codegen_flags: <defaults>
</compile_context>

<pallas_src>
import jax
import jax.numpy as jnp
from jax.experimental import pallas as pl
from jax.experimental.pallas import tpu as pltpu


def dqn_kernel(x_ref, w1_ref, b1_ref, w2_ref, b2_ref, w3_ref, b3_ref, o_ref):
    # Transposed layout: columns = batch samples (128-lane axis).
    # x arrives in f32; cast to bf16 here (free VPU cast, avoids an extra
    # wrapper-side HBM pass over x).
    xt = x_ref[...].astype(w1_ref.dtype)                                 # (S, tb)
    # Layer 1: h1^T = W1 @ x^T, bf16 MXU, f32 accumulation; bias + ReLU in f32.
    h1 = jnp.dot(w1_ref[...], xt, preferred_element_type=jnp.float32)    # (32, tb)
    h1 = jnp.maximum(h1 + b1_ref[...], 0.0)
    # Layer 2.
    h2 = jnp.dot(w2_ref[...], h1.astype(w2_ref.dtype),
                 preferred_element_type=jnp.float32)                     # (32, tb)
    h2 = jnp.maximum(h2 + b2_ref[...], 0.0)
    # Layer 3: Linear, no activation.
    out = jnp.dot(w3_ref[...], h2.astype(w3_ref.dtype),
                  preferred_element_type=jnp.float32)                    # (A, tb)
    o_ref[...] = (out + b3_ref[...]).astype(o_ref.dtype)


def _round_up(v, m):
    return (v + m - 1) // m * m


def dqn_forward(x, params, *, tile_b=2048, num_cores=1,
                compute_dtype=jnp.bfloat16, out_dtype=jnp.float32):
    """DQN forward.

    x:      (B, state_size) float32
    params: dict of w1,b1,w2,b2,w3,b3 in PyTorch-native layout:
            w: (out_features, in_features), b: (out_features,)
    num_cores: set to 2 on v7x so the parallel batch axis spans both TensorCores.
    """
    w1, b1, w2, b2, w3, b3 = (params[k] for k in ("w1", "b1", "w2", "b2", "w3", "b3"))
    B, state_size = x.shape
    hidden = w1.shape[0]
    action_size = w3.shape[0]

    # Layout plumbing: batch on the lane axis. Tiny (B x 8) transpose.
    xt = x.T                                                   # (state_size, B), f32
    w1c, w2c, w3c = (w.astype(compute_dtype) for w in (w1, w2, w3))
    b1c, b2c, b3c = (b.reshape(-1, 1).astype(jnp.float32) for b in (b1, b2, b3))

    # Batch tile (lanes). Single full-batch step when it fits (v5e/v6e);
    # otherwise multiples of 256 so each layer streams full MXU columns.
    per_core = pl.cdiv(B, num_cores)
    if num_cores == 1 and per_core <= tile_b:
        tile = B                      # full-array block: no alignment constraint
    else:
        tile = _round_up(min(tile_b, per_core), 256)
    grid = (pl.cdiv(B, tile),)

    def resident(shape):
        # Same block every grid step -> stays VMEM-resident (no re-DMA).
        return pl.BlockSpec(shape, lambda i: (0, 0))

    flops = 2 * B * (state_size * hidden + hidden * hidden + hidden * action_size)
    bytes_accessed = (
        xt.size * 4                                            # f32 x read
        + sum(a.size * a.dtype.itemsize for a in (w1c, w2c, w3c, b1c, b2c, b3c))
        + B * action_size * jnp.dtype(out_dtype).itemsize      # output writeback
    )
    cost = pl.CostEstimate(flops=flops, transcendentals=0,
                           bytes_accessed=bytes_accessed)

    out_t = pl.pallas_call(
        dqn_kernel,
        out_shape=jax.ShapeDtypeStruct((action_size, B), out_dtype),
        grid=grid,
        in_specs=[
            pl.BlockSpec((state_size, tile), lambda i: (0, i)),
            resident(w1c.shape), resident(b1c.shape),
            resident(w2c.shape), resident(b2c.shape),
            resident(w3c.shape), resident(b3c.shape),
        ],
        out_specs=pl.BlockSpec((action_size, tile), lambda i: (0, i)),
        compiler_params=pltpu.CompilerParams(
            dimension_semantics=("parallel",),
        ),
        cost_estimate=cost,
    )(xt, w1c, b1c, w2c, b2c, w3c, b3c)

    return out_t.T                                             # (B, action_size)


def init_params(key, state_size, action_size, hidden=32):
    """Deterministic synthetic weights, PyTorch-native (out_features, in_features)."""
    ks = jax.random.split(key, 6)

    def lin(kw, kb, fan_in, fan_out):
        bound = 1.0 / jnp.sqrt(fan_in)
        w = jax.random.uniform(kw, (fan_out, fan_in), jnp.float32, -bound, bound)
        b = jax.random.uniform(kb, (fan_out,), jnp.float32, -bound, bound)
        return w, b

    w1, b1 = lin(ks[0], ks[1], state_size, hidden)
    w2, b2 = lin(ks[2], ks[3], hidden, hidden)
    w3, b3 = lin(ks[4], ks[5], hidden, action_size)
    return dict(w1=w1, b1=b1, w2=w2, b2=b2, w3=w3, b3=b3)


def dqn_reference_f32(x, p):
    h1 = jnp.maximum(x @ p["w1"].T + p["b1"], 0.0)
    h2 = jnp.maximum(h1 @ p["w2"].T + p["b2"], 0.0)
    return h2 @ p["w3"].T + p["b3"]


def dqn_reference_bf16(x, p):
    bf = jnp.bfloat16
    h1 = jnp.dot(x.astype(bf), p["w1"].T.astype(bf),
                 preferred_element_type=jnp.float32) + p["b1"]
    h1 = jnp.maximum(h1, 0.0)
    h2 = jnp.dot(h1.astype(bf), p["w2"].T.astype(bf),
                 preferred_element_type=jnp.float32) + p["b2"]
    h2 = jnp.maximum(h2, 0.0)
    return jnp.dot(h2.astype(bf), p["w3"].T.astype(bf),
                   preferred_element_type=jnp.float32) + p["b3"]


if __name__ == "__main__":
    key = jax.random.PRNGKey(0)
    k_x, k_x2, k_p = jax.random.split(key, 3)

    state_size = 8
    action_size = 4
    params = init_params(k_p, state_size, action_size)

    # Small, spec-consistent case: batch=8 -> single full-array grid step.
    batch = 8
    x = jax.random.normal(k_x, (batch, state_size), jnp.float32)
    out = jax.block_until_ready(dqn_forward(x, params))
    assert out.shape == (batch, action_size), out.shape
    assert jnp.allclose(out, dqn_reference_bf16(x, params), atol=1e-3, rtol=1e-3), \
        "mismatch vs bf16 reference"
    assert jnp.allclose(out, dqn_reference_f32(x, params), atol=3e-2, rtol=3e-2), \
        "mismatch vs f32 reference"

    # Ragged batch, default tile: whole batch in one lane-dense grid step.
    batch2 = 1000
    x2 = jax.random.normal(k_x2, (batch2, state_size), jnp.float32)
    out2 = jax.block_until_ready(dqn_forward(x2, params))
    assert out2.shape == (batch2, action_size), out2.shape
    assert jnp.allclose(out2, dqn_reference_bf16(x2, params), atol=1e-3, rtol=1e-3), \
        "mismatch vs bf16 reference (single-step)"
    assert jnp.allclose(out2, dqn_reference_f32(x2, params), atol=3e-2, rtol=3e-2), \
        "mismatch vs f32 reference (single-step)"

    # Multi-step grid with a partial edge block (1000 rows, 512-lane tiles):
    # exercises batch pipelining and the last-tile writeback masking.
    out3 = jax.block_until_ready(dqn_forward(x2, params, tile_b=512, num_cores=2))
    assert out3.shape == (batch2, action_size), out3.shape
    assert jnp.allclose(out3, dqn_reference_bf16(x2, params), atol=1e-3, rtol=1e-3), \
        "mismatch vs bf16 reference (tiled)"
    assert jnp.allclose(out3, dqn_reference_f32(x2, params), atol=3e-2, rtol=3e-2), \
        "mismatch vs f32 reference (tiled)"

    print("KERNEL_OK")
</pallas_src>

<mosaic_0001>
module attributes {stable_mosaic.version = 11 : i64} {
  func.func @dqn_kernel(%arg0: i32, %arg1: memref<8x8xf32, #tpu.memory_space<vmem>>, %arg2: memref<32x8xbf16, #tpu.memory_space<vmem>>, %arg3: memref<32x1xf32, #tpu.memory_space<vmem>>, %arg4: memref<32x32xbf16, #tpu.memory_space<vmem>>, %arg5: memref<32x1xf32, #tpu.memory_space<vmem>>, %arg6: memref<4x32xbf16, #tpu.memory_space<vmem>>, %arg7: memref<4x1xf32, #tpu.memory_space<vmem>>, %arg8: memref<4x8xf32, #tpu.memory_space<vmem>>) attributes {dimension_semantics = [#tpu.dimension_semantics<parallel>], iteration_bounds = array<i64: 1>, scalar_prefetch = 0 : i64, scratch_operands = 0 : i64, tpu.core_type = #tpu.core_type<tc>, window_params = [{transform_indices = @transform_0, window_bounds = array<i64: 8, 8>}, {pipeline_mode = #tpu.pipeline_mode<synchronous>, transform_indices = @transform_1, window_bounds = array<i64: 32, 8>}, {pipeline_mode = #tpu.pipeline_mode<synchronous>, transform_indices = @transform_2, window_bounds = array<i64: 32, 1>}, {pipeline_mode = #tpu.pipeline_mode<synchronous>, transform_indices = @transform_3, window_bounds = array<i64: 32, 32>}, {pipeline_mode = #tpu.pipeline_mode<synchronous>, transform_indices = @transform_4, window_bounds = array<i64: 32, 1>}, {pipeline_mode = #tpu.pipeline_mode<synchronous>, transform_indices = @transform_5, window_bounds = array<i64: 4, 32>}, {pipeline_mode = #tpu.pipeline_mode<synchronous>, transform_indices = @transform_6, window_bounds = array<i64: 4, 1>}, {transform_indices = @transform_7, window_bounds = array<i64: 4, 8>}]} {
    %c0 = arith.constant 0 : index
    %c0_0 = arith.constant 0 : index
    %0 = vector.load %arg1[%c0, %c0_0] : memref<8x8xf32, #tpu.memory_space<vmem>>, vector<8x8xf32>
    %1 = arith.truncf %0 : vector<8x8xf32> to vector<8x8xbf16>
    %c0_1 = arith.constant 0 : index
    %c0_2 = arith.constant 0 : index
    %2 = vector.load %arg2[%c0_1, %c0_2] : memref<32x8xbf16, #tpu.memory_space<vmem>>, vector<32x8xbf16>
    %cst = arith.constant dense<0.000000e+00> : vector<32x8xf32>
    %3 = tpu.matmul %2, %1, %cst {dimension_numbers = #tpu.dot_dimension_numbers<[1], [0], [0], [1], [0, 0, 1, 1], [], []>} : vector<32x8xbf16>, vector<8x8xbf16>, vector<32x8xf32> -> vector<32x8xf32>
    %c0_3 = arith.constant 0 : index
    %c0_4 = arith.constant 0 : index
    %4 = vector.load %arg3[%c0_3, %c0_4] : memref<32x1xf32, #tpu.memory_space<vmem>>, vector<32x1xf32>
    %5 = vector.broadcast %4 : vector<32x1xf32> to vector<32x8xf32>
    %6 = arith.addf %3, %5 : vector<32x8xf32>
    %cst_5 = arith.constant 0.000000e+00 : f32
    %7 = vector.broadcast %cst_5 : f32 to vector<32x8xf32>
    %8 = arith.maximumf %6, %7 : vector<32x8xf32>
    %c0_6 = arith.constant 0 : index
    %c0_7 = arith.constant 0 : index
    %9 = vector.load %arg4[%c0_6, %c0_7] : memref<32x32xbf16, #tpu.memory_space<vmem>>, vector<32x32xbf16>
    %10 = arith.truncf %8 : vector<32x8xf32> to vector<32x8xbf16>
    %cst_8 = arith.constant dense<0.000000e+00> : vector<32x8xf32>
    %11 = tpu.matmul %9, %10, %cst_8 {dimension_numbers = #tpu.dot_dimension_numbers<[1], [0], [0], [1], [0, 0, 1, 1], [], []>} : vector<32x32xbf16>, vector<32x8xbf16>, vector<32x8xf32> -> vector<32x8xf32>
    %c0_9 = arith.constant 0 : index
    %c0_10 = arith.constant 0 : index
    %12 = vector.load %arg5[%c0_9, %c0_10] : memref<32x1xf32, #tpu.memory_space<vmem>>, vector<32x1xf32>
    %13 = vector.broadcast %12 : vector<32x1xf32> to vector<32x8xf32>
    %14 = arith.addf %11, %13 : vector<32x8xf32>
    %cst_11 = arith.constant 0.000000e+00 : f32
    %15 = vector.broadcast %cst_11 : f32 to vector<32x8xf32>
    %16 = arith.maximumf %14, %15 : vector<32x8xf32>
    %c0_12 = arith.constant 0 : index
    %c0_13 = arith.constant 0 : index
    %17 = vector.load %arg6[%c0_12, %c0_13] : memref<4x32xbf16, #tpu.memory_space<vmem>>, vector<4x32xbf16>
    %18 = arith.truncf %16 : vector<32x8xf32> to vector<32x8xbf16>
    %cst_14 = arith.constant dense<0.000000e+00> : vector<4x8xf32>
    %19 = tpu.matmul %17, %18, %cst_14 {dimension_numbers = #tpu.dot_dimension_numbers<[1], [0], [0], [1], [0, 0, 1, 1], [], []>} : vector<4x32xbf16>, vector<32x8xbf16>, vector<4x8xf32> -> vector<4x8xf32>
    %c0_15 = arith.constant 0 : index
    %c0_16 = arith.constant 0 : index
    %20 = vector.load %arg7[%c0_15, %c0_16] : memref<4x1xf32, #tpu.memory_space<vmem>>, vector<4x1xf32>
    %21 = vector.broadcast %20 : vector<4x1xf32> to vector<4x8xf32>
    %22 = arith.addf %19, %21 : vector<4x8xf32>
    %c0_17 = arith.constant 0 : index
    %c0_18 = arith.constant 0 : index
    %23 = vector.load %arg8[%c0_17, %c0_18] : memref<4x8xf32, #tpu.memory_space<vmem>>, vector<4x8xf32>
    tpu.vector_store %arg8[%c0_17, %c0_18], %22 {strides = array<i32>} : memref<4x8xf32, #tpu.memory_space<vmem>>, vector<4x8xf32>,
    return
  }
  func.func @transform_0(%arg0: i32) -> (i32, i32) {
    %c0_i32 = arith.constant 0 : i32
    %c0_i32_0 = arith.constant 0 : i32
    return %c0_i32, %arg0 : i32, i32
  }
  func.func @transform_1(%arg0: i32) -> (i32, i32) {
    %c0_i32 = arith.constant 0 : i32
    %c0_i32_0 = arith.constant 0 : i32
    %c0_i32_1 = arith.constant 0 : i32
    return %c0_i32, %c0_i32_0 : i32, i32
  }
  func.func @transform_2(%arg0: i32) -> (i32, i32) {
    %c0_i32 = arith.constant 0 : i32
    %c0_i32_0 = arith.constant 0 : i32
    %c0_i32_1 = arith.constant 0 : i32
    return %c0_i32, %c0_i32_0 : i32, i32
  }
  func.func @transform_3(%arg0: i32) -> (i32, i32) {
    %c0_i32 = arith.constant 0 : i32
    %c0_i32_0 = arith.constant 0 : i32
    %c0_i32_1 = arith.constant 0 : i32
    return %c0_i32, %c0_i32_0 : i32, i32
  }
  func.func @transform_4(%arg0: i32) -> (i32, i32) {
    %c0_i32 = arith.constant 0 : i32
    %c0_i32_0 = arith.constant 0 : i32
    %c0_i32_1 = arith.constant 0 : i32
    return %c0_i32, %c0_i32_0 : i32, i32
  }
  func.func @transform_5(%arg0: i32) -> (i32, i32) {
    %c0_i32 = arith.constant 0 : i32
    %c0_i32_0 = arith.constant 0 : i32
    %c0_i32_1 = arith.constant 0 : i32
    return %c0_i32, %c0_i32_0 : i32, i32
  }
  func.func @transform_6(%arg0: i32) -> (i32, i32) {
    %c0_i32 = arith.constant 0 : i32
    %c0_i32_0 = arith.constant 0 : i32
    %c0_i32_1 = arith.constant 0 : i32
    return %c0_i32, %c0_i32_0 : i32, i32
  }
  func.func @transform_7(%arg0: i32) -> (i32, i32) {
    %c0_i32 = arith.constant 0 : i32
    %c0_i32_0 = arith.constant 0 : i32
    return %c0_i32, %arg0 : i32, i32
  }
}

</mosaic_0001>

<llo_original>
// kernel: tpu_custom_call.1
$region0: #{tpu_custom_call.1}
  #allocation0 [shape = 'u32[]', space=smem, size = 0x4, offset = 0x4, fixed_abs, tag = 'smem constant byte address 0x4 - core index']
  #allocation1 [shape = 'u32[144,128]{1,0:T(1,128)}', space=vmem, size = 0x12000, scoped, tag = 'internal scratch']
  %s0 = inlined_call_operand.vmem [shape: f32[8,8], index: 0, kind: input, shape index: {}]
  %s1 = inlined_call_operand.vmem [shape: bf16[32,8], index: 1, kind: input, shape index: {}]
  %s2 = inlined_call_operand.vmem [shape: f32[32,1], index: 2, kind: input, shape index: {}]
  %s3 = inlined_call_operand.vmem [shape: bf16[32,32], index: 3, kind: input, shape index: {}]
  %s4 = inlined_call_operand.vmem [shape: f32[32,1], index: 4, kind: input, shape index: {}]
  %s5 = inlined_call_operand.vmem [shape: bf16[4,32], index: 5, kind: input, shape index: {}]
  %s6 = inlined_call_operand.vmem [shape: f32[4,1], index: 6, kind: input, shape index: {}]
  %s7 = inlined_call_operand.hbm [shape: f32[4,8], index: 7, kind: output, shape index: {}]
  %s8 = sld [smem:[#allocation0]]
  $region38: #{tpu_custom_call.1} parent=0
    _
  %s10 = ssub.s32 1, %s8
  %s11 = scalar_select 0, %s10, %s8
  $region1: #{tpu_custom_call.1} parent=0
    #allocation2 [shape = 'u8[2048]{0}', space=vmem, size = 0x800, scoped, tag = 'output window, operand 0, single buffered']
    #allocation3 [shape = 's32[1]{0}', space=sflag, size = 0x4, scoped, tag = 'scoped memory for tpu_custom_call.1']
    %12 = vsyncpa [#allocation3], 0
    // Predicated region
    $region2: #{tpu_custom_call.1} parent=1 // pred_check
      _
    $region3: #{tpu_custom_call.1} parent=1 // pred_check_branch
      %14 = sbr.rel (0) target = $region5
    $region4: #{tpu_custom_call.1} parent=1 // pred_region
      _
    $region5: #{tpu_custom_call.1} parent=1 // pred_fallthru
      _
    // Predicated region
    $region6: #{tpu_custom_call.1} parent=1 // pred_check
      _
    $region7: #{tpu_custom_call.1} parent=1 // pred_check_branch
      %16 = sbr.rel (0) target = $region9
    $region8: #{tpu_custom_call.1} parent=1 // pred_region
      _
    $region9: #{tpu_custom_call.1} parent=1 // pred_fallthru
      _
    // Predicated region
    $region10: #{tpu_custom_call.1} parent=1 // pred_check
      _
    $region11: #{tpu_custom_call.1} parent=1 // pred_check_branch
      %18 = sbr.rel (0) target = $region13
    $region12: #{tpu_custom_call.1} parent=1 // pred_region
      _
    $region13: #{tpu_custom_call.1} parent=1 // pred_fallthru
      _
    // Predicated region
    $region14: #{tpu_custom_call.1} parent=1 // pred_check
      _
    $region15: #{tpu_custom_call.1} parent=1 // pred_check_branch
      %20 = sbr.rel (0) target = $region17
    $region16: #{tpu_custom_call.1} parent=1 // pred_region
      _
    $region17: #{tpu_custom_call.1} parent=1 // pred_fallthru
      _
    // Predicated region
    $region18: #{tpu_custom_call.1} parent=1 // pred_check
      _
    $region19: #{tpu_custom_call.1} parent=1 // pred_check_branch
      %22 = sbr.rel (0) target = $region21
    $region20: #{tpu_custom_call.1} parent=1 // pred_region
      _
    $region21: #{tpu_custom_call.1} parent=1 // pred_fallthru
      _
    // Predicated region
    $region22: #{tpu_custom_call.1} parent=1 // pred_check
      _
    $region23: #{tpu_custom_call.1} parent=1 // pred_check_branch
      %24 = sbr.rel (0) target = $region25
    $region24: #{tpu_custom_call.1} parent=1 // pred_region
      _
    $region25: #{tpu_custom_call.1} parent=1 // pred_fallthru
      _
    // Predicated region
    $region26: #{tpu_custom_call.1} parent=1 // pred_check
      _
    $region27: #{tpu_custom_call.1} parent=1 // pred_check_branch
      %26 = sbr.rel (0) target = $region29
    $region28: #{tpu_custom_call.1} parent=1 // pred_region
      _
    $region29: #{tpu_custom_call.1} parent=1 // pred_fallthru
      _
    %v28 = vld [vmem:[%s0] sm:$0xff]
    %v29 = vpack.c.bf16 %v28, %v28
    %v30 = vld [vmem:[%s1] sm:$0xf]
    %v31 = vld [vmem:[%s1 + $0x4] sm:$0xf]
    %v32 = vld [vmem:[%s1 + $0x8] sm:$0xf]
    %v33 = vld [vmem:[%s1 + $0xc] sm:$0xf]
    %v34 = vld [vmem:[%s2] sm:$0xff]
    %v35 = vld [vmem:[%s2 + $0x8] sm:$0xff]
    %v36 = vld [vmem:[%s2 + $0x10] sm:$0xff]
    %v37 = vld [vmem:[%s2 + $0x18] sm:$0xff]
    %39 = vset.pattern.permute.xlu0 0
    %40 = vperm.xlu0 %39, %v34
    %v41 = vpop.permute.xlu0 %40
    %44 = vset.pattern.permute.xlu0 0
    %45 = vperm.xlu0 %44, %v35
    %v46 = vpop.permute.xlu0 %45
    %49 = vset.pattern.permute.xlu0 0
    %50 = vperm.xlu0 %49, %v36
    %v51 = vpop.permute.xlu0 %50
    %54 = vset.pattern.permute.xlu0 0
    %55 = vperm.xlu0 %54, %v37
    %v56 = vpop.permute.xlu0 %55
    %v62 = vunpack.c.l.b16 %v30
    %v63 = vunpack.c.l.b16 %v31
    %v64 = vunpack.c.l.b16 %v32
    %v65 = vunpack.c.l.b16 %v33
    %v66 = vpack.c.b16 %v63, %v62
    %v67 = vpack.c.b16 %v65, %v64
    %vm68 = vcmask 64512
    %v70 = vsel %vm68, %v66, 0
    %v73 = vsel %vm68, %v67, 0
    %vm75 = vcmask 1043456
    %v77 = vsel %vm75, %v29, 0
    %79 = vmatprep.subr.bf16.mxu0 0
    %80 = vmatpush1.bf16.msra.mxu0 %v77
    %81 = vmatprep.subr.bf16.mxu0 0
    %82 = vmatpush1.bf16.msra.mxu0 0
    %83 = vmatprep.subr.bf16.mxu0 0
    %84 = vmatpush1.bf16.msra.mxu0 0
    %85 = vmatprep.subr.bf16.mxu0 0
    %86 = vmatpush1.bf16.msra.mxu0 0
    %87 = vmatprep.subr.bf16.mxu0 0
    %88 = vmatpush1.bf16.msra.mxu0 0
    %89 = vmatprep.subr.bf16.mxu0 0
    %90 = vmatpush1.bf16.msra.mxu0 0
    %91 = vmatprep.subr.bf16.mxu0 0
    %92 = vmatpush1.bf16.msra.mxu0 0
    %93 = vmatprep.subr.bf16.mxu0 0
    %94 = vmatpush1.bf16.msra.mxu0 0
    %95 = vmatprep.subr.bf16.mxu0 0
    %96 = vmatpush1.bf16.msra.mxu0 0
    %97 = vmatprep.subr.bf16.mxu0 0
    %98 = vmatpush1.bf16.msra.mxu0 0
    %99 = vmatprep.subr.bf16.mxu0 0
    %100 = vmatpush1.bf16.msra.mxu0 0
    %101 = vmatprep.subr.bf16.mxu0 0
    %102 = vmatpush1.bf16.msra.mxu0 0
    %103 = vmatprep.subr.bf16.mxu0 0
    %104 = vmatpush1.bf16.msra.mxu0 0
    %105 = vmatprep.subr.bf16.mxu0 0
    %106 = vmatpush1.bf16.msra.mxu0 0
    %107 = vmatprep.subr.bf16.mxu0 0
    %108 = vmatpush1.bf16.msra.mxu0 0
    %109 = vmatprep.subr.bf16.mxu0 0
    %110 = vmatpush1.bf16.msra.mxu0 0
    %111 = vmatprep.mubr.bf16.mxu0 0
    %112 = vmatmul.mubr.bf16.gmra.mrb[0].mxu0 %v70
    %v113 = vpop.f32.mrb[0].mxu0
    %v114 = vadd.f32 %v41, %v113
    %v115 = vpop.f32.mrb[0].mxu0
    %v116 = vpop.f32.mrb[0].mxu0
    %v117 = vadd.f32 %v46, %v116
    %v118 = vpop.f32.mrb[0].mxu0
    %119 = vmatprep.mubr.bf16.mxu0 0
    %120 = vmatmul.mubr.bf16.gmra.mrb[0].mxu0 %v73
    %v121 = vpop.f32.mrb[0].mxu0
    %v122 = vadd.f32 %v51, %v121
    %v123 = vpop.f32.mrb[0].mxu0
    %v124 = vpop.f32.mrb[0].mxu0
    %v125 = vadd.f32 %v56, %v124
    %v126 = vpop.f32.mrb[0].mxu0
    %127 = vdwg.mxu0
    %v128 = vmax.f32 %v114, 0.0
    %v129 = vmax.f32 %v117, 0.0
    %v130 = vmax.f32 %v122, 0.0
    %v131 = vmax.f32 %v125, 0.0
    %v132 = vld [vmem:[%s3] sm:$0xf]
    %v133 = vld [vmem:[%s3 + $0x4] sm:$0xf]
    %v134 = vld [vmem:[%s3 + $0x8] sm:$0xf]
    %v135 = vld [vmem:[%s3 + $0xc] sm:$0xf]
    %v136 = vpack.c.bf16 %v129, %v128
    %v137 = vpack.c.bf16 %v131, %v130
    %v138 = vld [vmem:[%s4] sm:$0xff]
    %v139 = vld [vmem:[%s4 + $0x8] sm:$0xff]
    %v140 = vld [vmem:[%s4 + $0x10] sm:$0xff]
    %v141 = vld [vmem:[%s4 + $0x18] sm:$0xff]
    %143 = vset.pattern.permute.xlu0 0
    %144 = vperm.xlu0 %143, %v138
    %v145 = vpop.permute.xlu0 %144
    %148 = vset.pattern.permute.xlu0 0
    %149 = vperm.xlu0 %148, %v139
    %v150 = vpop.permute.xlu0 %149
    %153 = vset.pattern.permute.xlu0 0
    %154 = vperm.xlu0 %153, %v140
    %v155 = vpop.permute.xlu0 %154
    %158 = vset.pattern.permute.xlu0 0
    %159 = vperm.xlu0 %158, %v141
    %v160 = vpop.permute.xlu0 %159
    %v166 = vunpack.c.l.b16 %v132
    %v167 = vunpack.c.l.b16 %v133
    %v168 = vunpack.c.l.b16 %v134
    %v169 = vunpack.c.l.b16 %v135
    %v170 = vpack.c.b16 %v167, %v166
    %v171 = vpack.c.b16 %v169, %v168
    %vm172 = vcmask 261120
    %v174 = vsel %vm172, %v170, 0
    %v177 = vsel %vm172, %v171, 0
    %179 = vmatprep.subr.bf16.mxu0 0
    %180 = vmatpush1.bf16.msra.mxu0 %v136
    %181 = vmatprep.subr.bf16.mxu0 0
    %182 = vmatpush1.bf16.msra.mxu0 %v137
    %183 = vmatprep.subr.bf16.mxu0 0
    %184 = vmatpush1.bf16.msra.mxu0 0
    %185 = vmatprep.subr.bf16.mxu0 0
    %186 = vmatpush1.bf16.msra.mxu0 0
    %187 = vmatprep.subr.bf16.mxu0 0
    %188 = vmatpush1.bf16.msra.mxu0 0
    %189 = vmatprep.subr.bf16.mxu0 0
    %190 = vmatpush1.bf16.msra.mxu0 0
    %191 = vmatprep.subr.bf16.mxu0 0
    %192 = vmatpush1.bf16.msra.mxu0 0
    %193 = vmatprep.subr.bf16.mxu0 0
    %194 = vmatpush1.bf16.msra.mxu0 0
    %195 = vmatprep.subr.bf16.mxu0 0
    %196 = vmatpush1.bf16.msra.mxu0 0
    %197 = vmatprep.subr.bf16.mxu0 0
    %198 = vmatpush1.bf16.msra.mxu0 0
    %199 = vmatprep.subr.bf16.mxu0 0
    %200 = vmatpush1.bf16.msra.mxu0 0
    %201 = vmatprep.subr.bf16.mxu0 0
    %202 = vmatpush1.bf16.msra.mxu0 0
    %203 = vmatprep.subr.bf16.mxu0 0
    %204 = vmatpush1.bf16.msra.mxu0 0
    %205 = vmatprep.subr.bf16.mxu0 0
    %206 = vmatpush1.bf16.msra.mxu0 0
    %207 = vmatprep.subr.bf16.mxu0 0
    %208 = vmatpush1.bf16.msra.mxu0 0
    %209 = vmatprep.subr.bf16.mxu0 0
    %210 = vmatpush1.bf16.msra.mxu0 0
    %211 = vmatprep.mubr.bf16.mxu0 0
    %212 = vmatmul.mubr.bf16.gmra.mrb[0].mxu0 %v174
    %v213 = vpop.f32.mrb[0].mxu0
    %v214 = vadd.f32 %v145, %v213
    %v215 = vpop.f32.mrb[0].mxu0
    %v216 = vpop.f32.mrb[0].mxu0
    %v217 = vadd.f32 %v150, %v216
    %v218 = vpop.f32.mrb[0].mxu0
    %219 = vmatprep.mubr.bf16.mxu0 0
    %220 = vmatmul.mubr.bf16.gmra.mrb[0].mxu0 %v177
    %v221 = vpop.f32.mrb[0].mxu0
    %v222 = vadd.f32 %v155, %v221
    %v223 = vpop.f32.mrb[0].mxu0
    %v224 = vpop.f32.mrb[0].mxu0
    %v225 = vadd.f32 %v160, %v224
    %v226 = vpop.f32.mrb[0].mxu0
    %227 = vdwg.mxu0
    %v228 = vmax.f32 %v214, 0.0
    %v229 = vmax.f32 %v217, 0.0
    %v230 = vmax.f32 %v222, 0.0
    %v231 = vmax.f32 %v225, 0.0
    %v232 = vld [vmem:[%s5] sm:$0x3]
    %v233 = vpack.c.bf16 %v229, %v228
    %v234 = vpack.c.bf16 %v231, %v230
    %v235 = vld [vmem:[%s6] sm:$0xf]
    %237 = vset.pattern.permute.xlu0 0
    %238 = vperm.xlu0 %237, %v235
    %v239 = vpop.permute.xlu0 %238
    %v242 = vsel %vm172, %v232, 0
    %244 = vmatprep.subr.bf16.mxu0 0
    %245 = vmatpush1.bf16.msra.mxu0 %v233
    %246 = vmatprep.subr.bf16.mxu0 0
    %247 = vmatpush1.bf16.msra.mxu0 %v234
    %248 = vmatprep.subr.bf16.mxu0 0
    %249 = vmatpush1.bf16.msra.mxu0 0
    %250 = vmatprep.subr.bf16.mxu0 0
    %251 = vmatpush1.bf16.msra.mxu0 0
    %252 = vmatprep.subr.bf16.mxu0 0
    %253 = vmatpush1.bf16.msra.mxu0 0
    %254 = vmatprep.subr.bf16.mxu0 0
    %255 = vmatpush1.bf16.msra.mxu0 0
    %256 = vmatprep.subr.bf16.mxu0 0
    %257 = vmatpush1.bf16.msra.mxu0 0
    %258 = vmatprep.subr.bf16.mxu0 0
    %259 = vmatpush1.bf16.msra.mxu0 0
    %260 = vmatprep.subr.bf16.mxu0 0
    %261 = vmatpush1.bf16.msra.mxu0 0
    %262 = vmatprep.subr.bf16.mxu0 0
    %263 = vmatpush1.bf16.msra.mxu0 0
    %264 = vmatprep.subr.bf16.mxu0 0
    %265 = vmatpush1.bf16.msra.mxu0 0
    %266 = vmatprep.subr.bf16.mxu0 0
    %267 = vmatpush1.bf16.msra.mxu0 0
    %268 = vmatprep.subr.bf16.mxu0 0
    %269 = vmatpush1.bf16.msra.mxu0 0
    %270 = vmatprep.subr.bf16.mxu0 0
    %271 = vmatpush1.bf16.msra.mxu0 0
    %272 = vmatprep.subr.bf16.mxu0 0
    %273 = vmatpush1.bf16.msra.mxu0 0
    %274 = vmatprep.subr.bf16.mxu0 0
    %275 = vmatpush1.bf16.msra.mxu0 0
    %276 = vmatprep.mubr.bf16.mxu0 0
    %277 = vmatmul.mubr.bf16.gmra.mrb[0].mxu0 %v242
    %v278 = vpop.f32.mrb[0].mxu0
    %v279 = vadd.f32 %v239, %v278
    %v280 = vpop.f32.mrb[0].mxu0
    %v281 = vpop.f32.mrb[0].mxu0
    %v282 = vpop.f32.mrb[0].mxu0
    %283 = vdwg.mxu0
    %vm284 = vcmask 60416
    %285 = vst.msk [vmem:[#allocation2] sm:$0xf] %vm284, %v279
    // Predicated region
    $region30: #{tpu_custom_call.1} parent=1 // pred_check
      _
    $region31: #{tpu_custom_call.1} parent=1 // pred_check_branch
      %287 = sbr.rel (0) target = $region33
    $region32: #{tpu_custom_call.1} parent=1 // pred_region
      %s289 = ssub.s32 64, 64
      %290 = vsyncadd [#allocation3], %s289
      %s292 = sshll.u32 [#allocation2], 4
      %s293 = int_to_ptr.vmem [resolvable:$true] %s292
      %295 = dma.vmem_to_hbm [thread:$0]  %s293, 64, %s7, [#allocation3]
    $region33: #{tpu_custom_call.1} parent=1 // pred_fallthru
      _
    // Predicated region
    $region34: #{tpu_custom_call.1} parent=1 // pred_check
      _
    $region35: #{tpu_custom_call.1} parent=1 // pred_check_branch
      %297 = sbr.rel (0) target = $region37
    $region36: #{tpu_custom_call.1} parent=1 // pred_region
      %298 = dma.done [#allocation3], 64
    $region37: #{tpu_custom_call.1} parent=1 // pred_fallthru
      _
    %299 = vsyncpa [#allocation3], 1

</llo_original>
